<compile_context>
chip_gen: v6e
topology: v6e:2x2x1
jax: 0.10.0
libtpu: 0.0.40
codegen_flags: <defaults>
</compile_context>

<pallas_src>
import functools
import math

import jax
import jax.numpy as jnp
from jax import lax
from jax.experimental import pallas as pl
from jax.experimental.pallas import tpu as pltpu

EPS = 1e-5
LANE = 128          # lane width (last-dim alignment)
SUB = 8             # f32 sublane count (stats rows per tile)
MAX_TILE_M = 2048   # M-tile cap (power of two), shrunk by the VMEM budget below


def _round_up(x, m):
    return (x + m - 1) // m * m


def _vmem_limit_bytes():
    """Budget-aware VMEM limit: ~0.75x physical capacity, clamped to [32, 96] MiB."""
    try:
        info = pltpu.get_tpu_info()
        cap = getattr(info, "vmem_capacity_bytes", None)
        if cap:
            return max(32 * 1024 * 1024, min(int(cap) * 3 // 4, 96 * 1024 * 1024))
    except Exception:
        pass
    return 48 * 1024 * 1024     # safe on all generations (v7x has 64 MiB/TC)


VMEM_LIMIT = _vmem_limit_bytes()


def _tiling(m, row_bytes):
    """Largest power-of-two M-tile (<= MAX_TILE_M, >= 16) that (a) does not exceed M and
    (b) keeps the double-buffered tiled buffers within ~1/3 of the VMEM budget."""
    budget = VMEM_LIMIT // 3
    tile = MAX_TILE_M
    while tile > 16 and (tile > m or 2 * tile * row_bytes > budget):
        tile //= 2
    return tile, _round_up(m, tile)


def _cparams():
    return pltpu.CompilerParams(
        dimension_semantics=("parallel",),      # M-tiles are independent (megacore split)
        vmem_limit_bytes=VMEM_LIMIT)


# ----------------------------- Pallas kernels ------------------------------ #
def _conv_stats_kernel(p_ref, w_ref, y_ref, st_ref):
    # (TM, Kp) bf16 @ (Kp, Cp) bf16 -> f32 accumulate on the MXU.
    # No bias: it is mathematically cancelled by the following train-mode BatchNorm.
    y = jnp.dot(p_ref[...], w_ref[...], preferred_element_type=jnp.float32)
    y_ref[...] = y.astype(y_ref.dtype)          # bf16 store: halves the biggest HBM write
    # Per-tile per-channel stats from the f32 accumulator (single stats output:
    # row 0 = sum, row 1 = sum of squares, remaining rows zero).
    s = jnp.sum(y, axis=0, keepdims=True)
    ss = jnp.sum(y * y, axis=0, keepdims=True)
    rows = lax.broadcasted_iota(jnp.int32, (SUB, y.shape[1]), 0)
    st_ref[...] = jnp.where(rows == 0, s, jnp.where(rows == 1, ss, 0.0))


def _bn_relu_res_conv_kernel(y_ref, xr_ref, w_ref, scale_ref, shift_ref, b_ref, o_ref):
    # Last layer: BN + ReLU fused with the 1x1-conv residual branch (matmul rides on MXU
    # slack) and the final add -- a single HBM write of the block output.
    act = jnp.maximum(y_ref[...].astype(jnp.float32) * scale_ref[...] + shift_ref[...], 0.0)
    res = jnp.dot(xr_ref[...], w_ref[...],
                  preferred_element_type=jnp.float32) + b_ref[...]
    o_ref[...] = (act + res).astype(o_ref.dtype)


def _bn_relu_res_add_kernel(y_ref, xr_ref, scale_ref, shift_ref, o_ref):
    act = jnp.maximum(y_ref[...].astype(jnp.float32) * scale_ref[...] + shift_ref[...], 0.0)
    o_ref[...] = (act + xr_ref[...].astype(jnp.float32)).astype(o_ref.dtype)


# --------------------------- pallas_call wrappers --------------------------- #
def _conv_with_stats(p_pad, w_pad, tile_m):
    m_pad, k_pad = p_pad.shape
    c_pad = w_pad.shape[1]
    n_tiles = m_pad // tile_m
    return pl.pallas_call(
        _conv_stats_kernel,
        grid=(n_tiles,),
        in_specs=[pl.BlockSpec((tile_m, k_pad), lambda i: (i, 0)),
                  pl.BlockSpec((k_pad, c_pad), lambda i: (0, 0))],
        out_specs=[pl.BlockSpec((tile_m, c_pad), lambda i: (i, 0)),
                   pl.BlockSpec((SUB, c_pad), lambda i: (i, 0))],
        out_shape=[jax.ShapeDtypeStruct((m_pad, c_pad), jnp.bfloat16),
                   jax.ShapeDtypeStruct((n_tiles * SUB, c_pad), jnp.float32)],
        compiler_params=_cparams(),
    )(p_pad, w_pad)


def _bn_relu_residual_conv(y_pad, xr_pad, w_pad, scale, shift, bias, tile_m):
    m_pad, c_pad = y_pad.shape
    cin_pad = xr_pad.shape[1]
    n_tiles = m_pad // tile_m
    return pl.pallas_call(
        _bn_relu_res_conv_kernel,
        grid=(n_tiles,),
        in_specs=[pl.BlockSpec((tile_m, c_pad), lambda i: (i, 0)),
                  pl.BlockSpec((tile_m, cin_pad), lambda i: (i, 0)),
                  pl.BlockSpec((cin_pad, c_pad), lambda i: (0, 0)),
                  pl.BlockSpec((1, c_pad), lambda i: (0, 0)),
                  pl.BlockSpec((1, c_pad), lambda i: (0, 0)),
                  pl.BlockSpec((1, c_pad), lambda i: (0, 0))],
        out_specs=pl.BlockSpec((tile_m, c_pad), lambda i: (i, 0)),
        out_shape=jax.ShapeDtypeStruct((m_pad, c_pad), jnp.float32),
        compiler_params=_cparams(),
    )(y_pad, xr_pad, w_pad, scale, shift, bias)


def _bn_relu_residual_add(y_pad, xr_pad, scale, shift, tile_m):
    m_pad, c_pad = y_pad.shape
    n_tiles = m_pad // tile_m
    return pl.pallas_call(
        _bn_relu_res_add_kernel,
        grid=(n_tiles,),
        in_specs=[pl.BlockSpec((tile_m, c_pad), lambda i: (i, 0)),
                  pl.BlockSpec((tile_m, c_pad), lambda i: (i, 0)),
                  pl.BlockSpec((1, c_pad), lambda i: (0, 0)),
                  pl.BlockSpec((1, c_pad), lambda i: (0, 0))],
        out_specs=pl.BlockSpec((tile_m, c_pad), lambda i: (i, 0)),
        out_shape=jax.ShapeDtypeStruct((m_pad, c_pad), jnp.float32),
        compiler_params=_cparams(),
    )(y_pad, xr_pad, scale, shift)


# ------------------------------- glue (JAX) -------------------------------- #
def _im2col(x, k, stride):
    """x: (N, H, W, C) -> patches (N*Ho*Wo, k*k*C) with 'same' padding (k//2)."""
    N, H, W, C = x.shape
    p = k // 2
    xp = jnp.pad(x, ((0, 0), (p, p), (p, p), (0, 0)))
    Ho = (H + 2 * p - k) // stride + 1
    Wo = (W + 2 * p - k) // stride + 1
    cols = []
    for kh in range(k):
        for kw in range(k):
            cols.append(xp[:, kh:kh + stride * (Ho - 1) + 1:stride,
                              kw:kw + stride * (Wo - 1) + 1:stride, :])
    patches = jnp.stack(cols, axis=3)            # (N, Ho, Wo, k*k, C)
    return patches.reshape(N * Ho * Wo, k * k * C), (N, Ho, Wo)


def _pad2(a, rows, cols, dtype):
    r, c = a.shape
    return jnp.pad(a.astype(dtype), ((0, rows - r), (0, cols - c)))


def _pad_vec(v, c_pad):
    return jnp.pad(v.astype(jnp.float32), (0, c_pad - v.shape[0])).reshape(1, c_pad)


@functools.partial(jax.jit, static_argnums=(2, 3, 4))
def resnet_block_forward(x_nchw, params, kernel_channel_list, sample_down, in_channels):
    x = jnp.transpose(x_nchw, (0, 2, 3, 1)).astype(jnp.float32)   # NCHW -> NHWC
    y_act = x                                                     # current NHWC activation
    depth = len(kernel_channel_list)
    c_final = kernel_channel_list[-1][1]
    out = None

    for idx, (k, c_out) in enumerate(kernel_channel_list):
        stride = 2 if (idx == 0 and sample_down) else 1
        w, _b, gamma, beta = params[f'layer{idx}']   # conv bias cancelled by train-mode BN

        patches, (N, Ho, Wo) = _im2col(y_act.astype(jnp.bfloat16), k, stride)
        M, K = patches.shape
        k_pad = _round_up(K, LANE)
        c_pad = _round_up(c_out, LANE)
        tile_m, m_pad = _tiling(M, 2 * (k_pad + c_pad))   # bf16 rows of patches + output
        n_tiles = m_pad // tile_m

        p_pad = _pad2(patches, m_pad, k_pad, jnp.bfloat16)
        w_pad = _pad2(w.reshape(K, c_out), k_pad, c_pad, jnp.bfloat16)

        y_conv, stats = _conv_with_stats(p_pad, w_pad, tile_m)

        # Global batch statistics (biased variance == BatchNorm train mode).  Padded
        # rows/channels contribute exactly zero, so dividing by the true M is exact.
        st = stats.reshape(n_tiles, SUB, c_pad)
        ssum = st[:, 0, :].sum(axis=0)
        ssq = st[:, 1, :].sum(axis=0)
        mean = ssum / M
        # TODO(synk): single-pass E[y^2]-E[y]^2 is cancellation-prone when |mean| >> std;
        #             switch to per-tile centered sums (Chan combine) for such regimes.
        var = jnp.maximum(ssq / M - mean * mean, 0.0)
        scale_v = _pad_vec(gamma, c_pad)[0] * lax.rsqrt(var + EPS)
        shift_v = _pad_vec(beta, c_pad)[0] - mean * scale_v

        if idx < depth - 1:
            # Intermediate layer: apply scale/shift/ReLU lazily here; XLA fuses it into the
            # patch-extraction copy of the next conv (no standalone Pallas BN pass, and the
            # zero spatial-padding border of the next conv stays exactly zero).
            a = jnp.maximum(y_conv[:M, :c_out].astype(jnp.float32) * scale_v[:c_out]
                            + shift_v[:c_out], 0.0)
            y_act = a.astype(jnp.bfloat16).reshape(N, Ho, Wo, c_out)
        else:
            scale = scale_v.reshape(1, c_pad)
            shift = shift_v.reshape(1, c_pad)
            if sample_down or (in_channels != c_final):
                w1, b1 = params['conv_1x1']
                xr = x[:, ::2, ::2, :] if sample_down else x      # 1x1 conv, stride 2 or 1
                cin_pad = _round_up(in_channels, LANE)
                xr_pad = _pad2(xr.reshape(M, in_channels), m_pad, cin_pad, jnp.bfloat16)
                w1_pad = _pad2(w1.reshape(in_channels, c_final), cin_pad, c_pad, jnp.bfloat16)
                b1_pad = _pad_vec(b1, c_pad)
                out_pad = _bn_relu_residual_conv(y_conv, xr_pad, w1_pad,
                                                 scale, shift, b1_pad, tile_m)
            else:
                xr_pad = _pad2(x.reshape(M, c_final), m_pad, c_pad, jnp.bfloat16)
                out_pad = _bn_relu_residual_add(y_conv, xr_pad, scale, shift, tile_m)
            out = out_pad[:M, :c_final].reshape(N, Ho, Wo, c_final)

    return jnp.transpose(out, (0, 3, 1, 2))                       # NHWC -> NCHW


# --------------------------- pure-JAX reference ----------------------------- #
def ref_forward(x_nchw, params, kcl, sample_down, in_channels):
    x = x_nchw.astype(jnp.float32)
    y = x
    for idx, (k, c_out) in enumerate(kcl):
        stride = 2 if (idx == 0 and sample_down) else 1
        w, b, g, be = params[f'layer{idx}']
        y = lax.conv_general_dilated(
            y, w, (stride, stride), [(k // 2, k // 2)] * 2,
            dimension_numbers=('NCHW', 'HWIO', 'NCHW'),
            precision=lax.Precision.HIGHEST) + b.reshape(1, -1, 1, 1)
        mean = jnp.mean(y, axis=(0, 2, 3), keepdims=True)
        var = jnp.var(y, axis=(0, 2, 3), keepdims=True)
        y = (y - mean) / jnp.sqrt(var + EPS) * g.reshape(1, -1, 1, 1) + be.reshape(1, -1, 1, 1)
        y = jnp.maximum(y, 0.0)
    c_final = kcl[-1][1]
    if sample_down or in_channels != c_final:
        w1, b1 = params['conv_1x1']
        s = 2 if sample_down else 1
        x = lax.conv_general_dilated(
            x, w1, (s, s), [(0, 0), (0, 0)],
            dimension_numbers=('NCHW', 'HWIO', 'NCHW'),
            precision=lax.Precision.HIGHEST) + b1.reshape(1, -1, 1, 1)
    return y + x


# ------------------------------ param init --------------------------------- #
def init_params(key, in_channels, kcl, sample_down):
    params = {}
    c_in = in_channels
    for idx, (k, c_out) in enumerate(kcl):
        key, kw, kb = jax.random.split(key, 3)
        bound = 1.0 / math.sqrt(c_in * k * k)                      # PyTorch-style uniform init
        w = jax.random.uniform(kw, (k, k, c_in, c_out), jnp.float32, -bound, bound)  # HWIO
        b = jax.random.uniform(kb, (c_out,), jnp.float32, -bound, bound)
        gamma = jnp.ones((c_out,), jnp.float32)                    # BN defaults
        beta = jnp.zeros((c_out,), jnp.float32)
        params[f'layer{idx}'] = (w, b, gamma, beta)
        c_in = c_out
    if sample_down or in_channels != c_in:
        key, kw, kb = jax.random.split(key, 3)
        bound = 1.0 / math.sqrt(in_channels)
        w1 = jax.random.uniform(kw, (1, 1, in_channels, c_in), jnp.float32, -bound, bound)
        b1 = jax.random.uniform(kb, (c_in,), jnp.float32, -bound, bound)
        params['conv_1x1'] = (w1, b1)
    return params


if __name__ == "__main__":
    in_channels = 4
    kernel_channel_list = ((3, 8), (3, 8))      # hashable (static jit arg)
    sample_down = True

    key = jax.random.PRNGKey(0)
    key, kx = jax.random.split(key)
    x = jax.random.normal(kx, (2, in_channels, 16, 16), jnp.float32)   # NCHW, like PyTorch
    params = init_params(key, in_channels, kernel_channel_list, sample_down)

    out = resnet_block_forward(x, params, kernel_channel_list, sample_down, in_channels)
    out = jax.block_until_ready(out)

    ref = ref_forward(x, params, list(kernel_channel_list), sample_down, in_channels)
    assert out.shape == ref.shape == (2, 8, 8, 8), (out.shape, ref.shape)
    # bf16 matmul inputs / bf16 conv activations (f32 accumulation) vs f32 HIGHEST reference
    if not jnp.allclose(out, ref, atol=5e-2, rtol=5e-2):
        raise AssertionError(
            f"mismatch vs reference, max abs err = {float(jnp.max(jnp.abs(out - ref)))}")
    print("KERNEL_OK")
</pallas_src>

<mosaic_0001>
module attributes {stable_mosaic.version = 11 : i64} {
  func.func @_conv_stats_kernel(%arg0: i32, %arg1: memref<128x128xbf16, #tpu.memory_space<vmem>>, %arg2: memref<128x128xbf16, #tpu.memory_space<vmem>>, %arg3: memref<128x128xbf16, #tpu.memory_space<vmem>>, %arg4: memref<8x128xf32, #tpu.memory_space<vmem>>) attributes {dimension_semantics = [#tpu.dimension_semantics<parallel>], iteration_bounds = array<i64: 1>, scalar_prefetch = 0 : i64, scratch_operands = 0 : i64, tpu.core_type = #tpu.core_type<tc>, window_params = [{transform_indices = @transform_0, window_bounds = array<i64: 128, 128>}, {pipeline_mode = #tpu.pipeline_mode<synchronous>, transform_indices = @transform_1, window_bounds = array<i64: 128, 128>}, {transform_indices = @transform_2, window_bounds = array<i64: 128, 128>}, {transform_indices = @transform_3, window_bounds = array<i64: 8, 128>}]} {
    %c0 = arith.constant 0 : index
    %c0_0 = arith.constant 0 : index
    %0 = vector.load %arg1[%c0, %c0_0] : memref<128x128xbf16, #tpu.memory_space<vmem>>, vector<128x128xbf16>
    %c0_1 = arith.constant 0 : index
    %c0_2 = arith.constant 0 : index
    %1 = vector.load %arg2[%c0_1, %c0_2] : memref<128x128xbf16, #tpu.memory_space<vmem>>, vector<128x128xbf16>
    %cst = arith.constant dense<0.000000e+00> : vector<128x128xf32>
    %2 = tpu.matmul %0, %1, %cst {dimension_numbers = #tpu.dot_dimension_numbers<[1], [0], [0], [1], [0, 0, 1, 1], [], []>} : vector<128x128xbf16>, vector<128x128xbf16>, vector<128x128xf32> -> vector<128x128xf32>
    %3 = arith.truncf %2 : vector<128x128xf32> to vector<128x128xbf16>
    %c0_3 = arith.constant 0 : index
    %c0_4 = arith.constant 0 : index
    %4 = vector.load %arg3[%c0_3, %c0_4] : memref<128x128xbf16, #tpu.memory_space<vmem>>, vector<128x128xbf16>
    tpu.vector_store %arg3[%c0_3, %c0_4], %3 {strides = array<i32>} : memref<128x128xbf16, #tpu.memory_space<vmem>>, vector<128x128xbf16>,
    %cst_5 = arith.constant dense<0.000000e+00> : vector<128xf32>
    %5 = vector.multi_reduction <add>, %2, %cst_5 [0] : vector<128x128xf32> to vector<128xf32>
    %6 = vector.shape_cast %5 : vector<128xf32> to vector<1x128xf32>
    %7 = arith.mulf %2, %2 : vector<128x128xf32>
    %cst_6 = arith.constant dense<0.000000e+00> : vector<128xf32>
    %8 = vector.multi_reduction <add>, %7, %cst_6 [0] : vector<128x128xf32> to vector<128xf32>
    %9 = vector.shape_cast %8 : vector<128xf32> to vector<1x128xf32>
    %10 = tpu.iota {dimensions = array<i32: 0>} : vector<8x128xi32>
    %c0_i32 = arith.constant 0 : i32
    %11 = vector.broadcast %c0_i32 : i32 to vector<8x128xi32>
    %12 = arith.cmpi eq, %10, %11 : vector<8x128xi32>
    %c1_i32 = arith.constant 1 : i32
    %13 = vector.broadcast %c1_i32 : i32 to vector<8x128xi32>
    %14 = arith.cmpi eq, %10, %13 : vector<8x128xi32>
    %cst_7 = arith.constant 0.000000e+00 : f32
    %15 = vector.shape_cast %9 : vector<1x128xf32> to vector<1x128xf32>
    %16 = vector.broadcast %15 : vector<1x128xf32> to vector<8x128xf32>
    %17 = vector.broadcast %cst_7 : f32 to vector<8x128xf32>
    %18 = arith.select %14, %16, %17 : vector<8x128xi1>, vector<8x128xf32>
    %19 = vector.shape_cast %6 : vector<1x128xf32> to vector<1x128xf32>
    %20 = vector.broadcast %19 : vector<1x128xf32> to vector<8x128xf32>
    %21 = arith.select %12, %20, %18 : vector<8x128xi1>, vector<8x128xf32>
    %c0_8 = arith.constant 0 : index
    %c0_9 = arith.constant 0 : index
    %22 = vector.load %arg4[%c0_8, %c0_9] : memref<8x128xf32, #tpu.memory_space<vmem>>, vector<8x128xf32>
    tpu.vector_store %arg4[%c0_8, %c0_9], %21 {strides = array<i32>} : memref<8x128xf32, #tpu.memory_space<vmem>>, vector<8x128xf32>,
    return
  }
  func.func @transform_0(%arg0: i32) -> (i32, i32) {
    %c0_i32 = arith.constant 0 : i32
    %c0_i32_0 = arith.constant 0 : i32
    return %arg0, %c0_i32 : i32, i32
  }
  func.func @transform_1(%arg0: i32) -> (i32, i32) {
    %c0_i32 = arith.constant 0 : i32
    %c0_i32_0 = arith.constant 0 : i32
    %c0_i32_1 = arith.constant 0 : i32
    return %c0_i32, %c0_i32_0 : i32, i32
  }
  func.func @transform_2(%arg0: i32) -> (i32, i32) {
    %c0_i32 = arith.constant 0 : i32
    %c0_i32_0 = arith.constant 0 : i32
    return %arg0, %c0_i32 : i32, i32
  }
  func.func @transform_3(%arg0: i32) -> (i32, i32) {
    %c0_i32 = arith.constant 0 : i32
    %c0_i32_0 = arith.constant 0 : i32
    return %arg0, %c0_i32 : i32, i32
  }
}

module attributes {stable_mosaic.version = 11 : i64} {
  func.func @_bn_relu_res_conv_kernel(%arg0: i32, %arg1: memref<128x128xbf16, #tpu.memory_space<vmem>>, %arg2: memref<128x128xbf16, #tpu.memory_space<vmem>>, %arg3: memref<128x128xbf16, #tpu.memory_space<vmem>>, %arg4: memref<1x128xf32, #tpu.memory_space<vmem>>, %arg5: memref<1x128xf32, #tpu.memory_space<vmem>>, %arg6: memref<1x128xf32, #tpu.memory_space<vmem>>, %arg7: memref<128x128xf32, #tpu.memory_space<vmem>>) attributes {dimension_semantics = [#tpu.dimension_semantics<parallel>], iteration_bounds = array<i64: 1>, scalar_prefetch = 0 : i64, scratch_operands = 0 : i64, tpu.core_type = #tpu.core_type<tc>, window_params = [{transform_indices = @transform_0, window_bounds = array<i64: 128, 128>}, {transform_indices = @transform_1, window_bounds = array<i64: 128, 128>}, {pipeline_mode = #tpu.pipeline_mode<synchronous>, transform_indices = @transform_2, window_bounds = array<i64: 128, 128>}, {pipeline_mode = #tpu.pipeline_mode<synchronous>, transform_indices = @transform_3, window_bounds = array<i64: 1, 128>}, {pipeline_mode = #tpu.pipeline_mode<synchronous>, transform_indices = @transform_4, window_bounds = array<i64: 1, 128>}, {pipeline_mode = #tpu.pipeline_mode<synchronous>, transform_indices = @transform_5, window_bounds = array<i64: 1, 128>}, {transform_indices = @transform_6, window_bounds = array<i64: 128, 128>}]} {
    %c0 = arith.constant 0 : index
    %c0_0 = arith.constant 0 : index
    %0 = vector.load %arg1[%c0, %c0_0] : memref<128x128xbf16, #tpu.memory_space<vmem>>, vector<128x128xbf16>
    %1 = arith.extf %0 : vector<128x128xbf16> to vector<128x128xf32>
    %c0_1 = arith.constant 0 : index
    %c0_2 = arith.constant 0 : index
    %2 = vector.load %arg4[%c0_1, %c0_2] : memref<1x128xf32, #tpu.memory_space<vmem>>, vector<1x128xf32>
    %3 = vector.broadcast %2 : vector<1x128xf32> to vector<128x128xf32>
    %4 = arith.mulf %1, %3 : vector<128x128xf32>
    %c0_3 = arith.constant 0 : index
    %c0_4 = arith.constant 0 : index
    %5 = vector.load %arg5[%c0_3, %c0_4] : memref<1x128xf32, #tpu.memory_space<vmem>>, vector<1x128xf32>
    %6 = vector.broadcast %5 : vector<1x128xf32> to vector<128x128xf32>
    %7 = arith.addf %4, %6 : vector<128x128xf32>
    %cst = arith.constant 0.000000e+00 : f32
    %8 = vector.broadcast %cst : f32 to vector<128x128xf32>
    %9 = arith.maximumf %7, %8 : vector<128x128xf32>
    %c0_5 = arith.constant 0 : index
    %c0_6 = arith.constant 0 : index
    %10 = vector.load %arg2[%c0_5, %c0_6] : memref<128x128xbf16, #tpu.memory_space<vmem>>, vector<128x128xbf16>
    %c0_7 = arith.constant 0 : index
    %c0_8 = arith.constant 0 : index
    %11 = vector.load %arg3[%c0_7, %c0_8] : memref<128x128xbf16, #tpu.memory_space<vmem>>, vector<128x128xbf16>
    %cst_9 = arith.constant dense<0.000000e+00> : vector<128x128xf32>
    %12 = tpu.matmul %10, %11, %cst_9 {dimension_numbers = #tpu.dot_dimension_numbers<[1], [0], [0], [1], [0, 0, 1, 1], [], []>} : vector<128x128xbf16>, vector<128x128xbf16>, vector<128x128xf32> -> vector<128x128xf32>
    %c0_10 = arith.constant 0 : index
    %c0_11 = arith.constant 0 : index
    %13 = vector.load %arg6[%c0_10, %c0_11] : memref<1x128xf32, #tpu.memory_space<vmem>>, vector<1x128xf32>
    %14 = vector.broadcast %13 : vector<1x128xf32> to vector<128x128xf32>
    %15 = arith.addf %12, %14 : vector<128x128xf32>
    %16 = arith.addf %9, %15 : vector<128x128xf32>
    %c0_12 = arith.constant 0 : index
    %c0_13 = arith.constant 0 : index
    %17 = vector.load %arg7[%c0_12, %c0_13] : memref<128x128xf32, #tpu.memory_space<vmem>>, vector<128x128xf32>
    tpu.vector_store %arg7[%c0_12, %c0_13], %16 {strides = array<i32>} : memref<128x128xf32, #tpu.memory_space<vmem>>, vector<128x128xf32>,
    return
  }
  func.func @transform_0(%arg0: i32) -> (i32, i32) {
    %c0_i32 = arith.constant 0 : i32
    %c0_i32_0 = arith.constant 0 : i32
    return %arg0, %c0_i32 : i32, i32
  }
  func.func @transform_1(%arg0: i32) -> (i32, i32) {
    %c0_i32 = arith.constant 0 : i32
    %c0_i32_0 = arith.constant 0 : i32
    return %arg0, %c0_i32 : i32, i32
  }
  func.func @transform_2(%arg0: i32) -> (i32, i32) {
    %c0_i32 = arith.constant 0 : i32
    %c0_i32_0 = arith.constant 0 : i32
    %c0_i32_1 = arith.constant 0 : i32
    return %c0_i32, %c0_i32_0 : i32, i32
  }
  func.func @transform_3(%arg0: i32) -> (i32, i32) {
    %c0_i32 = arith.constant 0 : i32
    %c0_i32_0 = arith.constant 0 : i32
    %c0_i32_1 = arith.constant 0 : i32
    return %c0_i32, %c0_i32_0 : i32, i32
  }
  func.func @transform_4(%arg0: i32) -> (i32, i32) {
    %c0_i32 = arith.constant 0 : i32
    %c0_i32_0 = arith.constant 0 : i32
    %c0_i32_1 = arith.constant 0 : i32
    return %c0_i32, %c0_i32_0 : i32, i32
  }
  func.func @transform_5(%arg0: i32) -> (i32, i32) {
    %c0_i32 = arith.constant 0 : i32
    %c0_i32_0 = arith.constant 0 : i32
    %c0_i32_1 = arith.constant 0 : i32
    return %c0_i32, %c0_i32_0 : i32, i32
  }
  func.func @transform_6(%arg0: i32) -> (i32, i32) {
    %c0_i32 = arith.constant 0 : i32
    %c0_i32_0 = arith.constant 0 : i32
    return %arg0, %c0_i32 : i32, i32
  }
}

</mosaic_0001>

<llo_original>
// kernel: resnet_block_forward.3
$region0: #{resnet_block_forward.3}
  #allocation0 [shape = 'u32[]', space=smem, size = 0x4, offset = 0x4, fixed_abs, tag = 'smem constant byte address 0x4 - core index']
  #allocation1 [shape = 'u32[144,128]{1,0:T(1,128)}', space=vmem, size = 0x12000, scoped, tag = 'internal scratch']
  %s0 = inlined_call_operand.vmem [shape: bf16[128,128], index: 0, kind: input, shape index: {}]
  %s1 = inlined_call_operand.vmem [shape: bf16[128,128], index: 1, kind: input, shape index: {}]
  %s2 = inlined_call_operand.vmem [shape: bf16[128,128], index: 2, kind: output, shape index: {0}]
  %s3 = inlined_call_operand.vmem [shape: f32[8,128], index: 3, kind: output, shape index: {1}]
  %4 = xla_tuple %s2, %s3
  %s5 = sld [smem:[#allocation0]]
  $region26: #{resnet_block_forward.3} parent=0
    _
  %s7 = ssub.s32 1, %s5
  %s8 = scalar_select 0, %s7, %s5
  // Predicated region
  $region2: #{resnet_block_forward.3} parent=0 // pred_check
    _
  $region3: #{resnet_block_forward.3} parent=0 // pred_check_branch
    %10 = sbr.rel (0) target = $region5
  $region4: #{resnet_block_forward.3} parent=0 // pred_region
    _
  $region5: #{resnet_block_forward.3} parent=0 // pred_fallthru
    _
  // Predicated region
  $region6: #{resnet_block_forward.3} parent=0 // pred_check
    _
  $region7: #{resnet_block_forward.3} parent=0 // pred_check_branch
    %12 = sbr.rel (0) target = $region9
  $region8: #{resnet_block_forward.3} parent=0 // pred_region
    _
  $region9: #{resnet_block_forward.3} parent=0 // pred_fallthru
    _
  %v14 = vld [vmem:[%s0] sm:$0xf]
  %v15 = vld [vmem:[%s0 + $0x4] sm:$0xf]
  %v16 = vld [vmem:[%s0 + $0x8] sm:$0xf]
  %v17 = vld [vmem:[%s0 + $0xc] sm:$0xf]
  %v18 = vld [vmem:[%s0 + $0x10] sm:$0xf]
  %v19 = vld [vmem:[%s0 + $0x14] sm:$0xf]
  %v20 = vld [vmem:[%s0 + $0x18] sm:$0xf]
  %v21 = vld [vmem:[%s0 + $0x1c] sm:$0xf]
  %v22 = vld [vmem:[%s0 + $0x20] sm:$0xf]
  %v23 = vld [vmem:[%s0 + $0x24] sm:$0xf]
  %v24 = vld [vmem:[%s0 + $0x28] sm:$0xf]
  %v25 = vld [vmem:[%s0 + $0x2c] sm:$0xf]
  %v26 = vld [vmem:[%s0 + $0x30] sm:$0xf]
  %v27 = vld [vmem:[%s0 + $0x34] sm:$0xf]
  %v28 = vld [vmem:[%s0 + $0x38] sm:$0xf]
  %v29 = vld [vmem:[%s0 + $0x3c] sm:$0xf]
  %v30 = vld [vmem:[%s1] sm:$0xf]
  %v31 = vld [vmem:[%s1 + $0x4] sm:$0xf]
  %v32 = vld [vmem:[%s1 + $0x8] sm:$0xf]
  %v33 = vld [vmem:[%s1 + $0xc] sm:$0xf]
  %v34 = vld [vmem:[%s1 + $0x10] sm:$0xf]
  %v35 = vld [vmem:[%s1 + $0x14] sm:$0xf]
  %v36 = vld [vmem:[%s1 + $0x18] sm:$0xf]
  %v37 = vld [vmem:[%s1 + $0x1c] sm:$0xf]
  %v38 = vld [vmem:[%s1 + $0x20] sm:$0xf]
  %v39 = vld [vmem:[%s1 + $0x24] sm:$0xf]
  %v40 = vld [vmem:[%s1 + $0x28] sm:$0xf]
  %v41 = vld [vmem:[%s1 + $0x2c] sm:$0xf]
  %v42 = vld [vmem:[%s1 + $0x30] sm:$0xf]
  %v43 = vld [vmem:[%s1 + $0x34] sm:$0xf]
  %v44 = vld [vmem:[%s1 + $0x38] sm:$0xf]
  %v45 = vld [vmem:[%s1 + $0x3c] sm:$0xf]
  %v62 = vunpack.c.l.b16 %v14
  %v63 = vunpack.c.l.b16 %v15
  %v64 = vunpack.c.l.b16 %v16
  %v65 = vunpack.c.l.b16 %v17
  %v66 = vunpack.c.l.b16 %v18
  %v67 = vunpack.c.l.b16 %v19
  %v68 = vunpack.c.l.b16 %v20
  %v69 = vunpack.c.l.b16 %v21
  %v70 = vunpack.c.l.b16 %v22
  %v71 = vunpack.c.l.b16 %v23
  %v72 = vunpack.c.l.b16 %v24
  %v73 = vunpack.c.l.b16 %v25
  %v74 = vunpack.c.l.b16 %v26
  %v75 = vunpack.c.l.b16 %v27
  %v76 = vunpack.c.l.b16 %v28
  %v77 = vunpack.c.l.b16 %v29
  %v78 = vpack.c.b16 %v63, %v62
  %v79 = vpack.c.b16 %v65, %v64
  %v80 = vpack.c.b16 %v67, %v66
  %v81 = vpack.c.b16 %v69, %v68
  %v82 = vpack.c.b16 %v71, %v70
  %v83 = vpack.c.b16 %v73, %v72
  %v84 = vpack.c.b16 %v75, %v74
  %v85 = vpack.c.b16 %v77, %v76
  %v110 = vunpack.c.l.b16 %v30
  %v111 = vunpack.c.l.b16 %v31
  %v112 = vunpack.c.l.b16 %v32
  %v113 = vunpack.c.l.b16 %v33
  %v114 = vunpack.c.l.b16 %v34
  %v115 = vunpack.c.l.b16 %v35
  %v116 = vunpack.c.l.b16 %v36
  %v117 = vunpack.c.l.b16 %v37
  %v118 = vunpack.c.l.b16 %v38
  %v119 = vunpack.c.l.b16 %v39
  %v120 = vunpack.c.l.b16 %v40
  %v121 = vunpack.c.l.b16 %v41
  %v122 = vunpack.c.l.b16 %v42
  %v123 = vunpack.c.l.b16 %v43
  %v124 = vunpack.c.l.b16 %v44
  %v125 = vunpack.c.l.b16 %v45
  %v126 = vpack.c.b16 %v111, %v110
  %v127 = vpack.c.b16 %v113, %v112
  %v128 = vpack.c.b16 %v115, %v114
  %v129 = vpack.c.b16 %v117, %v116
  %v130 = vpack.c.b16 %v119, %v118
  %v131 = vpack.c.b16 %v121, %v120
  %v132 = vpack.c.b16 %v123, %v122
  %v133 = vpack.c.b16 %v125, %v124
  %142 = vmatprep.subr.bf16.mxu0 0
  %143 = vmatpush1.bf16.msra.mxu0 %v133
  %144 = vmatprep.subr.bf16.mxu0 0
  %145 = vmatpush1.bf16.msra.mxu0 %v132
  %146 = vmatprep.subr.bf16.mxu0 0
  %147 = vmatpush1.bf16.msra.mxu0 %v131
  %148 = vmatprep.subr.bf16.mxu0 0
  %149 = vmatpush1.bf16.msra.mxu0 %v130
  %150 = vmatprep.subr.bf16.mxu0 0
  %151 = vmatpush1.bf16.msra.mxu0 %v129
  %152 = vmatprep.subr.bf16.mxu0 0
  %153 = vmatpush1.bf16.msra.mxu0 %v128
  %154 = vmatprep.subr.bf16.mxu0 0
  %155 = vmatpush1.bf16.msra.mxu0 %v127
  %156 = vmatprep.subr.bf16.mxu0 0
  %157 = vmatpush1.bf16.msra.mxu0 %v126
  %158 = vmatprep.subr.bf16.mxu0 0
  %159 = vmatpush2.bf16.msra.mxu0 0
  %160 = vmatprep.subr.bf16.mxu0 0
  %161 = vmatpush2.bf16.msra.mxu0 0
  %162 = vmatprep.subr.bf16.mxu0 0
  %163 = vmatpush2.bf16.msra.mxu0 0
  %164 = vmatprep.subr.bf16.mxu0 0
  %165 = vmatpush2.bf16.msra.mxu0 0
  %166 = vmatprep.subr.bf16.mxu0 0
  %167 = vmatpush2.bf16.msra.mxu0 0
  %168 = vmatprep.subr.bf16.mxu0 0
  %169 = vmatpush2.bf16.msra.mxu0 0
  %170 = vmatprep.subr.bf16.mxu0 0
  %171 = vmatpush2.bf16.msra.mxu0 0
  %172 = vmatprep.subr.bf16.mxu0 0
  %173 = vmatpush2.bf16.msra.mxu0 0
  %174 = vmatprep.mubr.bf16.mxu0 0
  %175 = vmatmul.mubr.bf16.gmra.mxu0 %v78
  %v176 = vpop.f32.mrf.mxu0
  %v177 = vadd.f32 0.0, %v176
  %v178 = vpop.f32.mrf.mxu0
  %v179 = vpop.f32.mrf.mxu0
  %v180 = vadd.f32 0.0, %v179
  %v181 = vpop.f32.mrf.mxu0
  %182 = vmatprep.mubr.bf16.mxu0 0
  %183 = vmatmul.mubr.bf16.gmra.mxu0 %v79
  %v184 = vpop.f32.mrf.mxu0
  %v185 = vadd.f32 0.0, %v184
  %v186 = vpop.f32.mrf.mxu0
  %v187 = vpop.f32.mrf.mxu0
  %v188 = vadd.f32 0.0, %v187
  %v189 = vpop.f32.mrf.mxu0
  %190 = vmatprep.mubr.bf16.mxu0 0
  %191 = vmatmul.mubr.bf16.gmra.mxu0 %v80
  %v192 = vpop.f32.mrf.mxu0
  %v193 = vadd.f32 0.0, %v192
  %v194 = vpop.f32.mrf.mxu0
  %v195 = vpop.f32.mrf.mxu0
  %v196 = vadd.f32 0.0, %v195
  %v197 = vpop.f32.mrf.mxu0
  %198 = vmatprep.mubr.bf16.mxu0 0
  %199 = vmatmul.mubr.bf16.gmra.mxu0 %v81
  %v200 = vpop.f32.mrf.mxu0
  %v201 = vadd.f32 0.0, %v200
  %v202 = vpop.f32.mrf.mxu0
  %v203 = vpop.f32.mrf.mxu0
  %v204 = vadd.f32 0.0, %v203
  %v205 = vpop.f32.mrf.mxu0
  %206 = vmatprep.mubr.bf16.mxu0 0
  %207 = vmatmul.mubr.bf16.gmra.mxu0 %v82
  %v208 = vpop.f32.mrf.mxu0
  %v209 = vadd.f32 0.0, %v208
  %v210 = vpop.f32.mrf.mxu0
  %v211 = vpop.f32.mrf.mxu0
  %v212 = vadd.f32 0.0, %v211
  %v213 = vpop.f32.mrf.mxu0
  %214 = vmatprep.mubr.bf16.mxu0 0
  %215 = vmatmul.mubr.bf16.gmra.mxu0 %v83
  %v216 = vpop.f32.mrf.mxu0
  %v217 = vadd.f32 0.0, %v216
  %v218 = vpop.f32.mrf.mxu0
  %v219 = vpop.f32.mrf.mxu0
  %v220 = vadd.f32 0.0, %v219
  %v221 = vpop.f32.mrf.mxu0
  %222 = vmatprep.mubr.bf16.mxu0 0
  %223 = vmatmul.mubr.bf16.gmra.mxu0 %v84
  %v224 = vpop.f32.mrf.mxu0
  %v225 = vadd.f32 0.0, %v224
  %v226 = vpop.f32.mrf.mxu0
  %v227 = vpop.f32.mrf.mxu0
  %v228 = vadd.f32 0.0, %v227
  %v229 = vpop.f32.mrf.mxu0
  %230 = vmatprep.mubr.bf16.mxu0 0
  %231 = vmatmul.mubr.bf16.gmra.mxu0 %v85
  %v232 = vpop.f32.mrf.mxu0
  %v233 = vadd.f32 0.0, %v232
  %v234 = vpop.f32.mrf.mxu0
  %v235 = vpop.f32.mrf.mxu0
  %v236 = vadd.f32 0.0, %v235
  %v237 = vpop.f32.mrf.mxu0
  %238 = vdwg.mxu0
  %v239 = vpack.c.bf16 %v180, %v177
  %v240 = vpack.c.bf16 %v188, %v185
  %v241 = vpack.c.bf16 %v196, %v193
  %v242 = vpack.c.bf16 %v204, %v201
  %v243 = vpack.c.bf16 %v212, %v209
  %v244 = vpack.c.bf16 %v220, %v217
  %v245 = vpack.c.bf16 %v228, %v225
  %v246 = vpack.c.bf16 %v236, %v233
  %v255 = vunpack.c.l.b16 %v239
  %v256 = vunpack.c.h.b16 %v239
  %v257 = vunpack.c.l.b16 %v240
  %v258 = vunpack.c.h.b16 %v240
  %v259 = vunpack.c.l.b16 %v241
  %v260 = vunpack.c.h.b16 %v241
  %v261 = vunpack.c.l.b16 %v242
  %v262 = vunpack.c.h.b16 %v242
  %v263 = vunpack.c.l.b16 %v243
  %v264 = vunpack.c.h.b16 %v243
  %v265 = vunpack.c.l.b16 %v244
  %v266 = vunpack.c.h.b16 %v244
  %v267 = vunpack.c.l.b16 %v245
  %v268 = vunpack.c.h.b16 %v245
  %v269 = vunpack.c.l.b16 %v246
  %v270 = vunpack.c.h.b16 %v246
  %v271 = vpack.c.b16 %v255, %v255
  %v272 = vpack.c.b16 %v256, %v256
  %v273 = vpack.c.b16 %v257, %v257
  %v274 = vpack.c.b16 %v258, %v258
  %v275 = vpack.c.b16 %v259, %v259
  %v276 = vpack.c.b16 %v260, %v260
  %v277 = vpack.c.b16 %v261, %v261
  %v278 = vpack.c.b16 %v262, %v262
  %v279 = vpack.c.b16 %v263, %v263
  %v280 = vpack.c.b16 %v264, %v264
  %v281 = vpack.c.b16 %v265, %v265
  %v282 = vpack.c.b16 %v266, %v266
  %v283 = vpack.c.b16 %v267, %v267
  %v284 = vpack.c.b16 %v268, %v268
  %v285 = vpack.c.b16 %v269, %v269
  %v286 = vpack.c.b16 %v270, %v270
  %303 = vst [vmem:[%s2] sm:$0xf] %v271
  %304 = vst [vmem:[%s2 + $0x4] sm:$0xf] %v272
  %305 = vst [vmem:[%s2 + $0x8] sm:$0xf] %v273
  %306 = vst [vmem:[%s2 + $0xc] sm:$0xf] %v274
  %307 = vst [vmem:[%s2 + $0x10] sm:$0xf] %v275
  %308 = vst [vmem:[%s2 + $0x14] sm:$0xf] %v276
  %309 = vst [vmem:[%s2 + $0x18] sm:$0xf] %v277
  %310 = vst [vmem:[%s2 + $0x1c] sm:$0xf] %v278
  %311 = vst [vmem:[%s2 + $0x20] sm:$0xf] %v279
  %312 = vst [vmem:[%s2 + $0x24] sm:$0xf] %v280
  %313 = vst [vmem:[%s2 + $0x28] sm:$0xf] %v281
  %314 = vst [vmem:[%s2 + $0x2c] sm:$0xf] %v282
  %315 = vst [vmem:[%s2 + $0x30] sm:$0xf] %v283
  %316 = vst [vmem:[%s2 + $0x34] sm:$0xf] %v284
  %317 = vst [vmem:[%s2 + $0x38] sm:$0xf] %v285
  %318 = vst [vmem:[%s2 + $0x3c] sm:$0xf] %v286
  %v319 = vadd.f32 %v177, %v180
  %v320 = vadd.f32 %v319, %v185
  %v321 = vadd.f32 %v320, %v188
  %v322 = vadd.f32 %v321, %v193
  %v323 = vadd.f32 %v322, %v196
  %v324 = vadd.f32 %v323, %v201
  %v325 = vadd.f32 %v324, %v204
  %v326 = vadd.f32 %v325, %v209
  %v327 = vadd.f32 %v326, %v212
  %v328 = vadd.f32 %v327, %v217
  %v329 = vadd.f32 %v328, %v220
  %v330 = vadd.f32 %v329, %v225
  %v331 = vadd.f32 %v330, %v228
  %v332 = vadd.f32 %v331, %v233
  %v333 = vadd.f32 %v332, %v236
  %v334 = vrot.slane %v333, 4
  %v335 = vadd.f32 %v333, %v334
  %v336 = vrot.slane %v335, 2
  %v337 = vadd.f32 %v335, %v336
  %v338 = vrot.slane %v337, 1
  %v339 = vadd.f32 %v337, %v338
  %v340 = vmul.f32 %v177, %v177
  %v341 = vmul.f32 %v180, %v180
  %v342 = vmul.f32 %v185, %v185
  %v343 = vmul.f32 %v188, %v188
  %v344 = vmul.f32 %v193, %v193
  %v345 = vmul.f32 %v196, %v196
  %v346 = vmul.f32 %v201, %v201
  %v347 = vmul.f32 %v204, %v204
  %v348 = vmul.f32 %v209, %v209
  %v349 = vmul.f32 %v212, %v212
  %v350 = vmul.f32 %v217, %v217
  %v351 = vmul.f32 %v220, %v220
  %v352 = vmul.f32 %v225, %v225
  %v353 = vmul.f32 %v228, %v228
  %v354 = vmul.f32 %v233, %v233
  %v355 = vmul.f32 %v236, %v236
  %v356 = vadd.f32 %v340, %v341
  %v357 = vadd.f32 %v356, %v342
  %v358 = vadd.f32 %v357, %v343
  %v359 = vadd.f32 %v358, %v344
  %v360 = vadd.f32 %v359, %v345
  %v361 = vadd.f32 %v360, %v346
  %v362 = vadd.f32 %v361, %v347
  %v363 = vadd.f32 %v362, %v348
  %v364 = vadd.f32 %v363, %v349
  %v365 = vadd.f32 %v364, %v350
  %v366 = vadd.f32 %v365, %v351
  %v367 = vadd.f32 %v366, %v352
  %v368 = vadd.f32 %v367, %v353
  %v369 = vadd.f32 %v368, %v354
  %v370 = vadd.f32 %v369, %v355
  %v371 = vrot.slane %v370, 4
  %v372 = vadd.f32 %v370, %v371
  %v373 = vrot.slane %v372, 2
  %v374 = vadd.f32 %v372, %v373
  %v375 = vrot.slane %v374, 1
  %v376 = vadd.f32 %v374, %v375
  %v377 = vlaneseq
  %v378 = vshrl.u32 %v377, 7
  %vm379 = vcmp.eq.s32.totalorder %v378, 0
  %vm380 = vcmp.eq.s32.totalorder %v378, 1
  %v381 = vsel %vm380, %v376, 0.0
  %v382 = vsel %vm379, %v339, %v381
  %383 = vst [vmem:[%s3] sm:$0xff] %v382
  // Predicated region
  $region10: #{resnet_block_forward.3} parent=0 // pred_check
    _
  $region11: #{resnet_block_forward.3} parent=0 // pred_check_branch
    %385 = sbr.rel (0) target = $region13
  $region12: #{resnet_block_forward.3} parent=0 // pred_region
    _
  $region13: #{resnet_block_forward.3} parent=0 // pred_fallthru
    _
  // Predicated region
  $region14: #{resnet_block_forward.3} parent=0 // pred_check
    _
  $region15: #{resnet_block_forward.3} parent=0 // pred_check_branch
    %387 = sbr.rel (0) target = $region17
  $region16: #{resnet_block_forward.3} parent=0 // pred_region
    _
  $region17: #{resnet_block_forward.3} parent=0 // pred_fallthru
    _
  // Predicated region
  $region18: #{resnet_block_forward.3} parent=0 // pred_check
    _
  $region19: #{resnet_block_forward.3} parent=0 // pred_check_branch
    %389 = sbr.rel (0) target = $region21
  $region20: #{resnet_block_forward.3} parent=0 // pred_region
    _
  $region21: #{resnet_block_forward.3} parent=0 // pred_fallthru
    _
  // Predicated region
  $region22: #{resnet_block_forward.3} parent=0 // pred_check
    _
  $region23: #{resnet_block_forward.3} parent=0 // pred_check_branch
    %391 = sbr.rel (0) target = $region25
  $region24: #{resnet_block_forward.3} parent=0 // pred_region
    _
  $region25: #{resnet_block_forward.3} parent=0 // pred_fallthru
    _

// kernel: resnet_block_forward.5
$region0: #{resnet_block_forward.5}
  #allocation0 [shape = 'u32[]', space=smem, size = 0x4, offset = 0x4, fixed_abs, tag = 'smem constant byte address 0x4 - core index']
  #allocation1 [shape = 'u32[144,128]{1,0:T(1,128)}', space=vmem, size = 0x12000, scoped, tag = 'internal scratch']
  %s0 = inlined_call_operand.vmem [shape: bf16[128,128], index: 0, kind: input, shape index: {}]
  %s1 = inlined_call_operand.vmem [shape: bf16[128,128], index: 1, kind: input, shape index: {}]
  %s2 = inlined_call_operand.vmem [shape: bf16[128,128], index: 2, kind: input, shape index: {}]
  %s3 = inlined_call_operand.vmem [shape: f32[1,128], index: 3, kind: input, shape index: {}]
  %s4 = inlined_call_operand.vmem [shape: f32[1,128], index: 4, kind: input, shape index: {}]
  %s5 = inlined_call_operand.vmem [shape: f32[1,128], index: 5, kind: input, shape index: {}]
  %s6 = inlined_call_operand.vmem [shape: f32[128,128], index: 6, kind: output, shape index: {}]
  %s7 = sld [smem:[#allocation0]]
  $region34: #{resnet_block_forward.5} parent=0
    _
  %s9 = ssub.s32 1, %s7
  %s10 = scalar_select 0, %s9, %s7
  // Predicated region
  $region2: #{resnet_block_forward.5} parent=0 // pred_check
    _
  $region3: #{resnet_block_forward.5} parent=0 // pred_check_branch
    %12 = sbr.rel (0) target = $region5
  $region4: #{resnet_block_forward.5} parent=0 // pred_region
    _
  $region5: #{resnet_block_forward.5} parent=0 // pred_fallthru
    _
  // Predicated region
  $region6: #{resnet_block_forward.5} parent=0 // pred_check
    _
  $region7: #{resnet_block_forward.5} parent=0 // pred_check_branch
    %14 = sbr.rel (0) target = $region9
  $region8: #{resnet_block_forward.5} parent=0 // pred_region
    _
  $region9: #{resnet_block_forward.5} parent=0 // pred_fallthru
    _
  // Predicated region
  $region10: #{resnet_block_forward.5} parent=0 // pred_check
    _
  $region11: #{resnet_block_forward.5} parent=0 // pred_check_branch
    %16 = sbr.rel (0) target = $region13
  $region12: #{resnet_block_forward.5} parent=0 // pred_region
    _
  $region13: #{resnet_block_forward.5} parent=0 // pred_fallthru
    _
  // Predicated region
  $region14: #{resnet_block_forward.5} parent=0 // pred_check
    _
  $region15: #{resnet_block_forward.5} parent=0 // pred_check_branch
    %18 = sbr.rel (0) target = $region17
  $region16: #{resnet_block_forward.5} parent=0 // pred_region
    _
  $region17: #{resnet_block_forward.5} parent=0 // pred_fallthru
    _
  // Predicated region
  $region18: #{resnet_block_forward.5} parent=0 // pred_check
    _
  $region19: #{resnet_block_forward.5} parent=0 // pred_check_branch
    %20 = sbr.rel (0) target = $region21
  $region20: #{resnet_block_forward.5} parent=0 // pred_region
    _
  $region21: #{resnet_block_forward.5} parent=0 // pred_fallthru
    _
  // Predicated region
  $region22: #{resnet_block_forward.5} parent=0 // pred_check
    _
  $region23: #{resnet_block_forward.5} parent=0 // pred_check_branch
    %22 = sbr.rel (0) target = $region25
  $region24: #{resnet_block_forward.5} parent=0 // pred_region
    _
  $region25: #{resnet_block_forward.5} parent=0 // pred_fallthru
    _
  %v24 = vld [vmem:[%s0] sm:$0xf]
  %v25 = vld [vmem:[%s0 + $0x4] sm:$0xf]
  %v26 = vld [vmem:[%s0 + $0x8] sm:$0xf]
  %v27 = vld [vmem:[%s0 + $0xc] sm:$0xf]
  %v28 = vld [vmem:[%s0 + $0x10] sm:$0xf]
  %v29 = vld [vmem:[%s0 + $0x14] sm:$0xf]
  %v30 = vld [vmem:[%s0 + $0x18] sm:$0xf]
  %v31 = vld [vmem:[%s0 + $0x1c] sm:$0xf]
  %v32 = vld [vmem:[%s0 + $0x20] sm:$0xf]
  %v33 = vld [vmem:[%s0 + $0x24] sm:$0xf]
  %v34 = vld [vmem:[%s0 + $0x28] sm:$0xf]
  %v35 = vld [vmem:[%s0 + $0x2c] sm:$0xf]
  %v36 = vld [vmem:[%s0 + $0x30] sm:$0xf]
  %v37 = vld [vmem:[%s0 + $0x34] sm:$0xf]
  %v38 = vld [vmem:[%s0 + $0x38] sm:$0xf]
  %v39 = vld [vmem:[%s0 + $0x3c] sm:$0xf]
  %v40 = vunpack.c.l.bf16 %v24
  %v41 = vunpack.c.l.bf16 %v25
  %v42 = vunpack.c.l.bf16 %v26
  %v43 = vunpack.c.l.bf16 %v27
  %v44 = vunpack.c.l.bf16 %v28
  %v45 = vunpack.c.l.bf16 %v29
  %v46 = vunpack.c.l.bf16 %v30
  %v47 = vunpack.c.l.bf16 %v31
  %v48 = vunpack.c.l.bf16 %v32
  %v49 = vunpack.c.l.bf16 %v33
  %v50 = vunpack.c.l.bf16 %v34
  %v51 = vunpack.c.l.bf16 %v35
  %v52 = vunpack.c.l.bf16 %v36
  %v53 = vunpack.c.l.bf16 %v37
  %v54 = vunpack.c.l.bf16 %v38
  %v55 = vunpack.c.l.bf16 %v39
  %v56 = vld [vmem:[%s3] sm:$0x1]
  %v58 = vlaneseq
  %v59 = vshrl.u32 %v58, 7
  %v60 = vsub.s32 0, %v59
  %v61 = vrot.slane %v56, %v60
  %v63 = vmul.f32 %v40, %v61
  %v64 = vmul.f32 %v41, %v61
  %v65 = vmul.f32 %v42, %v61
  %v66 = vmul.f32 %v43, %v61
  %v67 = vmul.f32 %v44, %v61
  %v68 = vmul.f32 %v45, %v61
  %v69 = vmul.f32 %v46, %v61
  %v70 = vmul.f32 %v47, %v61
  %v71 = vmul.f32 %v48, %v61
  %v72 = vmul.f32 %v49, %v61
  %v73 = vmul.f32 %v50, %v61
  %v74 = vmul.f32 %v51, %v61
  %v75 = vmul.f32 %v52, %v61
  %v76 = vmul.f32 %v53, %v61
  %v77 = vmul.f32 %v54, %v61
  %v78 = vmul.f32 %v55, %v61
  %v79 = vld [vmem:[%s4] sm:$0x1]
  %v81 = vlaneseq
  %v82 = vshrl.u32 %v81, 7
  %v83 = vsub.s32 0, %v82
  %v84 = vrot.slane %v79, %v83
  %v86 = vadd.f32 %v63, %v84
  %v87 = vadd.f32 %v64, %v84
  %v88 = vadd.f32 %v65, %v84
  %v89 = vadd.f32 %v66, %v84
  %v90 = vadd.f32 %v67, %v84
  %v91 = vadd.f32 %v68, %v84
  %v92 = vadd.f32 %v69, %v84
  %v93 = vadd.f32 %v70, %v84
  %v94 = vadd.f32 %v71, %v84
  %v95 = vadd.f32 %v72, %v84
  %v96 = vadd.f32 %v73, %v84
  %v97 = vadd.f32 %v74, %v84
  %v98 = vadd.f32 %v75, %v84
  %v99 = vadd.f32 %v76, %v84
  %v100 = vadd.f32 %v77, %v84
  %v101 = vadd.f32 %v78, %v84
  %v102 = vmax.f32 %v86, 0.0
  %v103 = vmax.f32 %v87, 0.0
  %v104 = vmax.f32 %v88, 0.0
  %v105 = vmax.f32 %v89, 0.0
  %v106 = vmax.f32 %v90, 0.0
  %v107 = vmax.f32 %v91, 0.0
  %v108 = vmax.f32 %v92, 0.0
  %v109 = vmax.f32 %v93, 0.0
  %v110 = vmax.f32 %v94, 0.0
  %v111 = vmax.f32 %v95, 0.0
  %v112 = vmax.f32 %v96, 0.0
  %v113 = vmax.f32 %v97, 0.0
  %v114 = vmax.f32 %v98, 0.0
  %v115 = vmax.f32 %v99, 0.0
  %v116 = vmax.f32 %v100, 0.0
  %v117 = vmax.f32 %v101, 0.0
  %v118 = vld [vmem:[%s1] sm:$0xf]
  %v119 = vld [vmem:[%s1 + $0x4] sm:$0xf]
  %v120 = vld [vmem:[%s1 + $0x8] sm:$0xf]
  %v121 = vld [vmem:[%s1 + $0xc] sm:$0xf]
  %v122 = vld [vmem:[%s1 + $0x10] sm:$0xf]
  %v123 = vld [vmem:[%s1 + $0x14] sm:$0xf]
  %v124 = vld [vmem:[%s1 + $0x18] sm:$0xf]
  %v125 = vld [vmem:[%s1 + $0x1c] sm:$0xf]
  %v126 = vld [vmem:[%s1 + $0x20] sm:$0xf]
  %v127 = vld [vmem:[%s1 + $0x24] sm:$0xf]
  %v128 = vld [vmem:[%s1 + $0x28] sm:$0xf]
  %v129 = vld [vmem:[%s1 + $0x2c] sm:$0xf]
  %v130 = vld [vmem:[%s1 + $0x30] sm:$0xf]
  %v131 = vld [vmem:[%s1 + $0x34] sm:$0xf]
  %v132 = vld [vmem:[%s1 + $0x38] sm:$0xf]
  %v133 = vld [vmem:[%s1 + $0x3c] sm:$0xf]
  %v134 = vld [vmem:[%s2] sm:$0xf]
  %v135 = vld [vmem:[%s2 + $0x4] sm:$0xf]
  %v136 = vld [vmem:[%s2 + $0x8] sm:$0xf]
  %v137 = vld [vmem:[%s2 + $0xc] sm:$0xf]
  %v138 = vld [vmem:[%s2 + $0x10] sm:$0xf]
  %v139 = vld [vmem:[%s2 + $0x14] sm:$0xf]
  %v140 = vld [vmem:[%s2 + $0x18] sm:$0xf]
  %v141 = vld [vmem:[%s2 + $0x1c] sm:$0xf]
  %v142 = vld [vmem:[%s2 + $0x20] sm:$0xf]
  %v143 = vld [vmem:[%s2 + $0x24] sm:$0xf]
  %v144 = vld [vmem:[%s2 + $0x28] sm:$0xf]
  %v145 = vld [vmem:[%s2 + $0x2c] sm:$0xf]
  %v146 = vld [vmem:[%s2 + $0x30] sm:$0xf]
  %v147 = vld [vmem:[%s2 + $0x34] sm:$0xf]
  %v148 = vld [vmem:[%s2 + $0x38] sm:$0xf]
  %v149 = vld [vmem:[%s2 + $0x3c] sm:$0xf]
  %v150 = vld [vmem:[%s5] sm:$0x1]
  %v152 = vlaneseq
  %v153 = vshrl.u32 %v152, 7
  %v154 = vsub.s32 0, %v153
  %v155 = vrot.slane %v150, %v154
  %v173 = vunpack.c.l.b16 %v118
  %v174 = vunpack.c.l.b16 %v119
  %v175 = vunpack.c.l.b16 %v120
  %v176 = vunpack.c.l.b16 %v121
  %v177 = vunpack.c.l.b16 %v122
  %v178 = vunpack.c.l.b16 %v123
  %v179 = vunpack.c.l.b16 %v124
  %v180 = vunpack.c.l.b16 %v125
  %v181 = vunpack.c.l.b16 %v126
  %v182 = vunpack.c.l.b16 %v127
  %v183 = vunpack.c.l.b16 %v128
  %v184 = vunpack.c.l.b16 %v129
  %v185 = vunpack.c.l.b16 %v130
  %v186 = vunpack.c.l.b16 %v131
  %v187 = vunpack.c.l.b16 %v132
  %v188 = vunpack.c.l.b16 %v133
  %v189 = vpack.c.b16 %v174, %v173
  %v190 = vpack.c.b16 %v176, %v175
  %v191 = vpack.c.b16 %v178, %v177
  %v192 = vpack.c.b16 %v180, %v179
  %v193 = vpack.c.b16 %v182, %v181
  %v194 = vpack.c.b16 %v184, %v183
  %v195 = vpack.c.b16 %v186, %v185
  %v196 = vpack.c.b16 %v188, %v187
  %v221 = vunpack.c.l.b16 %v134
  %v222 = vunpack.c.l.b16 %v135
  %v223 = vunpack.c.l.b16 %v136
  %v224 = vunpack.c.l.b16 %v137
  %v225 = vunpack.c.l.b16 %v138
  %v226 = vunpack.c.l.b16 %v139
  %v227 = vunpack.c.l.b16 %v140
  %v228 = vunpack.c.l.b16 %v141
  %v229 = vunpack.c.l.b16 %v142
  %v230 = vunpack.c.l.b16 %v143
  %v231 = vunpack.c.l.b16 %v144
  %v232 = vunpack.c.l.b16 %v145
  %v233 = vunpack.c.l.b16 %v146
  %v234 = vunpack.c.l.b16 %v147
  %v235 = vunpack.c.l.b16 %v148
  %v236 = vunpack.c.l.b16 %v149
  %v237 = vpack.c.b16 %v222, %v221
  %v238 = vpack.c.b16 %v224, %v223
  %v239 = vpack.c.b16 %v226, %v225
  %v240 = vpack.c.b16 %v228, %v227
  %v241 = vpack.c.b16 %v230, %v229
  %v242 = vpack.c.b16 %v232, %v231
  %v243 = vpack.c.b16 %v234, %v233
  %v244 = vpack.c.b16 %v236, %v235
  %253 = vmatprep.subr.bf16.mxu0 0
  %254 = vmatpush1.bf16.msra.mxu0 %v244
  %255 = vmatprep.subr.bf16.mxu0 0
  %256 = vmatpush1.bf16.msra.mxu0 %v243
  %257 = vmatprep.subr.bf16.mxu0 0
  %258 = vmatpush1.bf16.msra.mxu0 %v242
  %259 = vmatprep.subr.bf16.mxu0 0
  %260 = vmatpush1.bf16.msra.mxu0 %v241
  %261 = vmatprep.subr.bf16.mxu0 0
  %262 = vmatpush1.bf16.msra.mxu0 %v240
  %263 = vmatprep.subr.bf16.mxu0 0
  %264 = vmatpush1.bf16.msra.mxu0 %v239
  %265 = vmatprep.subr.bf16.mxu0 0
  %266 = vmatpush1.bf16.msra.mxu0 %v238
  %267 = vmatprep.subr.bf16.mxu0 0
  %268 = vmatpush1.bf16.msra.mxu0 %v237
  %269 = vmatprep.subr.bf16.mxu0 0
  %270 = vmatpush2.bf16.msra.mxu0 0
  %271 = vmatprep.subr.bf16.mxu0 0
  %272 = vmatpush2.bf16.msra.mxu0 0
  %273 = vmatprep.subr.bf16.mxu0 0
  %274 = vmatpush2.bf16.msra.mxu0 0
  %275 = vmatprep.subr.bf16.mxu0 0
  %276 = vmatpush2.bf16.msra.mxu0 0
  %277 = vmatprep.subr.bf16.mxu0 0
  %278 = vmatpush2.bf16.msra.mxu0 0
  %279 = vmatprep.subr.bf16.mxu0 0
  %280 = vmatpush2.bf16.msra.mxu0 0
  %281 = vmatprep.subr.bf16.mxu0 0
  %282 = vmatpush2.bf16.msra.mxu0 0
  %283 = vmatprep.subr.bf16.mxu0 0
  %284 = vmatpush2.bf16.msra.mxu0 0
  %285 = vmatprep.mubr.bf16.mxu0 0
  %286 = vmatmul.mubr.bf16.gmra.mxu0 %v189
  %v287 = vpop.f32.mrf.mxu0
  %v288 = vadd.f32 %v155, %v287
  %v289 = vpop.f32.mrf.mxu0
  %v290 = vpop.f32.mrf.mxu0
  %v291 = vadd.f32 %v155, %v290
  %v292 = vpop.f32.mrf.mxu0
  %293 = vmatprep.mubr.bf16.mxu0 0
  %294 = vmatmul.mubr.bf16.gmra.mxu0 %v190
  %v295 = vpop.f32.mrf.mxu0
  %v296 = vadd.f32 %v155, %v295
  %v297 = vpop.f32.mrf.mxu0
  %v298 = vpop.f32.mrf.mxu0
  %v299 = vadd.f32 %v155, %v298
  %v300 = vpop.f32.mrf.mxu0
  %301 = vmatprep.mubr.bf16.mxu0 0
  %302 = vmatmul.mubr.bf16.gmra.mxu0 %v191
  %v303 = vpop.f32.mrf.mxu0
  %v304 = vadd.f32 %v155, %v303
  %v305 = vpop.f32.mrf.mxu0
  %v306 = vpop.f32.mrf.mxu0
  %v307 = vadd.f32 %v155, %v306
  %v308 = vpop.f32.mrf.mxu0
  %309 = vmatprep.mubr.bf16.mxu0 0
  %310 = vmatmul.mubr.bf16.gmra.mxu0 %v192
  %v311 = vpop.f32.mrf.mxu0
  %v312 = vadd.f32 %v155, %v311
  %v313 = vpop.f32.mrf.mxu0
  %v314 = vpop.f32.mrf.mxu0
  %v315 = vadd.f32 %v155, %v314
  %v316 = vpop.f32.mrf.mxu0
  %317 = vmatprep.mubr.bf16.mxu0 0
  %318 = vmatmul.mubr.bf16.gmra.mxu0 %v193
  %v319 = vpop.f32.mrf.mxu0
  %v320 = vadd.f32 %v155, %v319
  %v321 = vpop.f32.mrf.mxu0
  %v322 = vpop.f32.mrf.mxu0
  %v323 = vadd.f32 %v155, %v322
  %v324 = vpop.f32.mrf.mxu0
  %325 = vmatprep.mubr.bf16.mxu0 0
  %326 = vmatmul.mubr.bf16.gmra.mxu0 %v194
  %v327 = vpop.f32.mrf.mxu0
  %v328 = vadd.f32 %v155, %v327
  %v329 = vpop.f32.mrf.mxu0
  %v330 = vpop.f32.mrf.mxu0
  %v331 = vadd.f32 %v155, %v330
  %v332 = vpop.f32.mrf.mxu0
  %333 = vmatprep.mubr.bf16.mxu0 0
  %334 = vmatmul.mubr.bf16.gmra.mxu0 %v195
  %v335 = vpop.f32.mrf.mxu0
  %v336 = vadd.f32 %v155, %v335
  %v337 = vpop.f32.mrf.mxu0
  %v338 = vpop.f32.mrf.mxu0
  %v339 = vadd.f32 %v155, %v338
  %v340 = vpop.f32.mrf.mxu0
  %341 = vmatprep.mubr.bf16.mxu0 0
  %342 = vmatmul.mubr.bf16.gmra.mxu0 %v196
  %v343 = vpop.f32.mrf.mxu0
  %v344 = vadd.f32 %v155, %v343
  %v345 = vpop.f32.mrf.mxu0
  %v346 = vpop.f32.mrf.mxu0
  %v347 = vadd.f32 %v155, %v346
  %v348 = vpop.f32.mrf.mxu0
  %349 = vdwg.mxu0
  %v350 = vadd.f32 %v102, %v288
  %v351 = vadd.f32 %v103, %v291
  %v352 = vadd.f32 %v104, %v296
  %v353 = vadd.f32 %v105, %v299
  %v354 = vadd.f32 %v106, %v304
  %v355 = vadd.f32 %v107, %v307
  %v356 = vadd.f32 %v108, %v312
  %v357 = vadd.f32 %v109, %v315
  %v358 = vadd.f32 %v110, %v320
  %v359 = vadd.f32 %v111, %v323
  %v360 = vadd.f32 %v112, %v328
  %v361 = vadd.f32 %v113, %v331
  %v362 = vadd.f32 %v114, %v336
  %v363 = vadd.f32 %v115, %v339
  %v364 = vadd.f32 %v116, %v344
  %v365 = vadd.f32 %v117, %v347
  %366 = vst [vmem:[%s6] sm:$0xff] %v350
  %367 = vst [vmem:[%s6 + $0x8] sm:$0xff] %v351
  %368 = vst [vmem:[%s6 + $0x10] sm:$0xff] %v352
  %369 = vst [vmem:[%s6 + $0x18] sm:$0xff] %v353
  %370 = vst [vmem:[%s6 + $0x20] sm:$0xff] %v354
  %371 = vst [vmem:[%s6 + $0x28] sm:$0xff] %v355
  %372 = vst [vmem:[%s6 + $0x30] sm:$0xff] %v356
  %373 = vst [vmem:[%s6 + $0x38] sm:$0xff] %v357
  %374 = vst [vmem:[%s6 + $0x40] sm:$0xff] %v358
  %375 = vst [vmem:[%s6 + $0x48] sm:$0xff] %v359
  %376 = vst [vmem:[%s6 + $0x50] sm:$0xff] %v360
  %377 = vst [vmem:[%s6 + $0x58] sm:$0xff] %v361
  %378 = vst [vmem:[%s6 + $0x60] sm:$0xff] %v362
  %379 = vst [vmem:[%s6 + $0x68] sm:$0xff] %v363
  %380 = vst [vmem:[%s6 + $0x70] sm:$0xff] %v364
  %381 = vst [vmem:[%s6 + $0x78] sm:$0xff] %v365
  // Predicated region
  $region26: #{resnet_block_forward.5} parent=0 // pred_check
    _
  $region27: #{resnet_block_forward.5} parent=0 // pred_check_branch
    %383 = sbr.rel (0) target = $region29
  $region28: #{resnet_block_forward.5} parent=0 // pred_region
    _
  $region29: #{resnet_block_forward.5} parent=0 // pred_fallthru
    _
  // Predicated region
  $region30: #{resnet_block_forward.5} parent=0 // pred_check
    _
  $region31: #{resnet_block_forward.5} parent=0 // pred_check_branch
    %385 = sbr.rel (0) target = $region33
  $region32: #{resnet_block_forward.5} parent=0 // pred_region
    _
  $region33: #{resnet_block_forward.5} parent=0 // pred_fallthru
    _

</llo_original>
